<compile_context>
chip_gen: v6e
topology: v6e:2x2x1
jax: 0.10.0
libtpu: 0.0.40
codegen_flags: <defaults>
</compile_context>

<pallas_src>
import jax
import jax.numpy as jnp
from jax.experimental import pallas as pl
from jax.experimental.pallas import tpu as pltpu

IN_DIM = 4
H1 = 128
H2 = 256
OUT_DIM = 7          # len(tool_to_index)
MAX_TILE_B = 512     # sweet spot for pipelined HBM<->VMEM tiles; multiple of 8


def mlp_kernel(x_ref, w1_ref, b1_ref, w2_ref, b2_ref, w3_ref, b3_ref, o_ref):
    x = x_ref[...]                       # (TILE_B, 4)   f32
    w1 = w1_ref[...]                     # (4, 128)      f32

    # fc1 on the VPU: 4 broadcast multiply-adds (MXU would pad K=4 -> 128/256).
    h1 = x[:, 0:1] * w1[0:1, :]
    h1 = h1 + x[:, 1:2] * w1[1:2, :]
    h1 = h1 + x[:, 2:3] * w1[2:3, :]
    h1 = h1 + x[:, 3:4] * w1[3:4, :]
    h1 = jnp.maximum(h1 + b1_ref[...], 0.0)              # (TILE_B, 128) f32
    # dropout(p=0.5) == identity in eval mode.

    # fc2 on the MXU: bf16 operands, f32 accumulate, f32 bias + ReLU.
    h2 = jnp.dot(h1.astype(jnp.bfloat16), w2_ref[...],
                 preferred_element_type=jnp.float32)
    h2 = jnp.maximum(h2 + b2_ref[...], 0.0)               # (TILE_B, 256) f32

    # fc3 logits (no activation).
    o_ref[...] = jnp.dot(h2.astype(jnp.bfloat16), w3_ref[...],
                         preferred_element_type=jnp.float32) + b3_ref[...]


def _round_up(n, m):
    return (n + m - 1) // m * m


def prediction_model_forward(x, params):
    """x: (B, 4) float32; params: dict of f32 weights/biases. Returns (B, 7) f32 logits."""
    B = x.shape[0]
    tile_b = min(MAX_TILE_B, _round_up(max(B, 1), 8))     # multiple of 8 (f32 sublane)
    b_pad = _round_up(B, tile_b)
    num_tiles = b_pad // tile_b
    if b_pad != B:
        x = jnp.pad(x, ((0, b_pad - B), (0, 0)))          # zero rows; sliced off below

    w1 = params["w1"].astype(jnp.float32)
    b1 = params["b1"].astype(jnp.float32)
    w2 = params["w2"].astype(jnp.bfloat16)                # MXU-native, half the DMA bytes
    b2 = params["b2"].astype(jnp.float32)
    w3 = params["w3"].astype(jnp.bfloat16)
    b3 = params["b3"].astype(jnp.float32)

    def const(shape):
        # Same block every grid step -> weight stays resident in VMEM.
        return pl.BlockSpec(shape, lambda i: (0, 0))

    out = pl.pallas_call(
        mlp_kernel,
        out_shape=jax.ShapeDtypeStruct((b_pad, OUT_DIM), jnp.float32),
        grid=(num_tiles,),
        in_specs=[
            pl.BlockSpec((tile_b, IN_DIM), lambda i: (i, 0)),   # x, pipelined over batch
            const((IN_DIM, H1)),
            const((1, H1)),
            const((H1, H2)),
            const((1, H2)),
            const((H2, OUT_DIM)),
            const((1, OUT_DIM)),
        ],
        out_specs=pl.BlockSpec((tile_b, OUT_DIM), lambda i: (i, 0)),
        compiler_params=pltpu.CompilerParams(
            dimension_semantics=("parallel",)),               # 2x TC on v7x
    )(x, w1, b1, w2, b2, w3, b3)
    return out[:B]


def init_params(key):
    """Deterministic init matching PyTorch nn.Linear default (uniform +/- 1/sqrt(fan_in))."""
    def linear(key, fan_in, fan_out):
        kw, kb = jax.random.split(key)
        bound = 1.0 / jnp.sqrt(fan_in)
        # stored as (in, out) so kernel computes x @ W (== PyTorch x @ W.T + b)
        w = jax.random.uniform(kw, (fan_in, fan_out), jnp.float32, -bound, bound)
        b = jax.random.uniform(kb, (1, fan_out), jnp.float32, -bound, bound)
        return w, b

    k1, k2, k3 = jax.random.split(key, 3)
    w1, b1 = linear(k1, IN_DIM, H1)
    w2, b2 = linear(k2, H1, H2)
    w3, b3 = linear(k3, H2, OUT_DIM)
    return {"w1": w1, "b1": b1, "w2": w2, "b2": b2, "w3": w3, "b3": b3}


def reference_forward(x, p):
    """Plain-JAX reference using the same bf16 MXU path as the kernel."""
    h1 = jnp.maximum(x @ p["w1"] + p["b1"], 0.0)
    h2 = jnp.dot(h1.astype(jnp.bfloat16), p["w2"].astype(jnp.bfloat16),
                 preferred_element_type=jnp.float32) + p["b2"]
    h2 = jnp.maximum(h2, 0.0)
    return jnp.dot(h2.astype(jnp.bfloat16), p["w3"].astype(jnp.bfloat16),
                   preferred_element_type=jnp.float32) + p["b3"]


if __name__ == "__main__":
    key = jax.random.PRNGKey(0)
    kx, kp = jax.random.split(key)

    # Small demo batch; B=10 intentionally not a multiple of 8 to exercise padding.
    B = 10
    x = jax.random.normal(kx, (B, IN_DIM), jnp.float32)
    params = init_params(kp)

    out = prediction_model_forward(x, params)
    out = jax.block_until_ready(out)

    ref = reference_forward(x, params)
    assert out.shape == (B, OUT_DIM)
    assert jnp.allclose(out, ref, atol=1e-2, rtol=1e-2), (
        f"max abs err {jnp.max(jnp.abs(out - ref))}")

    print("KERNEL_OK")
</pallas_src>

<mosaic_0001>
module attributes {stable_mosaic.version = 11 : i64} {
  func.func @mlp_kernel(%arg0: i32, %arg1: memref<16x4xf32, #tpu.memory_space<vmem>>, %arg2: memref<4x128xf32, #tpu.memory_space<vmem>>, %arg3: memref<1x128xf32, #tpu.memory_space<vmem>>, %arg4: memref<128x256xbf16, #tpu.memory_space<vmem>>, %arg5: memref<1x256xf32, #tpu.memory_space<vmem>>, %arg6: memref<256x7xbf16, #tpu.memory_space<vmem>>, %arg7: memref<1x7xf32, #tpu.memory_space<vmem>>, %arg8: memref<16x7xf32, #tpu.memory_space<vmem>>) attributes {dimension_semantics = [#tpu.dimension_semantics<parallel>], iteration_bounds = array<i64: 1>, scalar_prefetch = 0 : i64, scratch_operands = 0 : i64, tpu.core_type = #tpu.core_type<tc>, window_params = [{transform_indices = @transform_0, window_bounds = array<i64: 16, 4>}, {pipeline_mode = #tpu.pipeline_mode<synchronous>, transform_indices = @transform_1, window_bounds = array<i64: 4, 128>}, {pipeline_mode = #tpu.pipeline_mode<synchronous>, transform_indices = @transform_2, window_bounds = array<i64: 1, 128>}, {pipeline_mode = #tpu.pipeline_mode<synchronous>, transform_indices = @transform_3, window_bounds = array<i64: 128, 256>}, {pipeline_mode = #tpu.pipeline_mode<synchronous>, transform_indices = @transform_4, window_bounds = array<i64: 1, 256>}, {pipeline_mode = #tpu.pipeline_mode<synchronous>, transform_indices = @transform_5, window_bounds = array<i64: 256, 7>}, {pipeline_mode = #tpu.pipeline_mode<synchronous>, transform_indices = @transform_6, window_bounds = array<i64: 1, 7>}, {transform_indices = @transform_7, window_bounds = array<i64: 16, 7>}]} {
    %c0 = arith.constant 0 : index
    %c0_0 = arith.constant 0 : index
    %0 = vector.load %arg1[%c0, %c0_0] : memref<16x4xf32, #tpu.memory_space<vmem>>, vector<16x4xf32>
    %c0_1 = arith.constant 0 : index
    %c0_2 = arith.constant 0 : index
    %1 = vector.load %arg2[%c0_1, %c0_2] : memref<4x128xf32, #tpu.memory_space<vmem>>, vector<4x128xf32>
    %2 = vector.extract_strided_slice %0 {offsets = [0, 0], sizes = [16, 1], strides = [1, 1]} : vector<16x4xf32> to vector<16x1xf32>
    %3 = vector.extract_strided_slice %1 {offsets = [0, 0], sizes = [1, 128], strides = [1, 1]} : vector<4x128xf32> to vector<1x128xf32>
    %4 = vector.broadcast %2 : vector<16x1xf32> to vector<16x128xf32>
    %5 = vector.broadcast %3 : vector<1x128xf32> to vector<16x128xf32>
    %6 = arith.mulf %4, %5 : vector<16x128xf32>
    %7 = vector.extract_strided_slice %0 {offsets = [0, 1], sizes = [16, 1], strides = [1, 1]} : vector<16x4xf32> to vector<16x1xf32>
    %8 = vector.extract_strided_slice %1 {offsets = [1, 0], sizes = [1, 128], strides = [1, 1]} : vector<4x128xf32> to vector<1x128xf32>
    %9 = vector.broadcast %7 : vector<16x1xf32> to vector<16x128xf32>
    %10 = vector.broadcast %8 : vector<1x128xf32> to vector<16x128xf32>
    %11 = arith.mulf %9, %10 : vector<16x128xf32>
    %12 = arith.addf %6, %11 : vector<16x128xf32>
    %13 = vector.extract_strided_slice %0 {offsets = [0, 2], sizes = [16, 1], strides = [1, 1]} : vector<16x4xf32> to vector<16x1xf32>
    %14 = vector.extract_strided_slice %1 {offsets = [2, 0], sizes = [1, 128], strides = [1, 1]} : vector<4x128xf32> to vector<1x128xf32>
    %15 = vector.broadcast %13 : vector<16x1xf32> to vector<16x128xf32>
    %16 = vector.broadcast %14 : vector<1x128xf32> to vector<16x128xf32>
    %17 = arith.mulf %15, %16 : vector<16x128xf32>
    %18 = arith.addf %12, %17 : vector<16x128xf32>
    %19 = vector.extract_strided_slice %0 {offsets = [0, 3], sizes = [16, 1], strides = [1, 1]} : vector<16x4xf32> to vector<16x1xf32>
    %20 = vector.extract_strided_slice %1 {offsets = [3, 0], sizes = [1, 128], strides = [1, 1]} : vector<4x128xf32> to vector<1x128xf32>
    %21 = vector.broadcast %19 : vector<16x1xf32> to vector<16x128xf32>
    %22 = vector.broadcast %20 : vector<1x128xf32> to vector<16x128xf32>
    %23 = arith.mulf %21, %22 : vector<16x128xf32>
    %24 = arith.addf %18, %23 : vector<16x128xf32>
    %c0_3 = arith.constant 0 : index
    %c0_4 = arith.constant 0 : index
    %25 = vector.load %arg3[%c0_3, %c0_4] : memref<1x128xf32, #tpu.memory_space<vmem>>, vector<1x128xf32>
    %26 = vector.broadcast %25 : vector<1x128xf32> to vector<16x128xf32>
    %27 = arith.addf %24, %26 : vector<16x128xf32>
    %cst = arith.constant 0.000000e+00 : f32
    %28 = vector.broadcast %cst : f32 to vector<16x128xf32>
    %29 = arith.maximumf %27, %28 : vector<16x128xf32>
    %30 = arith.truncf %29 : vector<16x128xf32> to vector<16x128xbf16>
    %c0_5 = arith.constant 0 : index
    %c0_6 = arith.constant 0 : index
    %31 = vector.load %arg4[%c0_5, %c0_6] : memref<128x256xbf16, #tpu.memory_space<vmem>>, vector<128x256xbf16>
    %cst_7 = arith.constant dense<0.000000e+00> : vector<16x256xf32>
    %32 = tpu.matmul %30, %31, %cst_7 {dimension_numbers = #tpu.dot_dimension_numbers<[1], [0], [0], [1], [0, 0, 1, 1], [], []>} : vector<16x128xbf16>, vector<128x256xbf16>, vector<16x256xf32> -> vector<16x256xf32>
    %c0_8 = arith.constant 0 : index
    %c0_9 = arith.constant 0 : index
    %33 = vector.load %arg5[%c0_8, %c0_9] : memref<1x256xf32, #tpu.memory_space<vmem>>, vector<1x256xf32>
    %34 = vector.broadcast %33 : vector<1x256xf32> to vector<16x256xf32>
    %35 = arith.addf %32, %34 : vector<16x256xf32>
    %cst_10 = arith.constant 0.000000e+00 : f32
    %36 = vector.broadcast %cst_10 : f32 to vector<16x256xf32>
    %37 = arith.maximumf %35, %36 : vector<16x256xf32>
    %38 = arith.truncf %37 : vector<16x256xf32> to vector<16x256xbf16>
    %c0_11 = arith.constant 0 : index
    %c0_12 = arith.constant 0 : index
    %39 = vector.load %arg6[%c0_11, %c0_12] : memref<256x7xbf16, #tpu.memory_space<vmem>>, vector<256x7xbf16>
    %cst_13 = arith.constant dense<0.000000e+00> : vector<16x7xf32>
    %40 = tpu.matmul %38, %39, %cst_13 {dimension_numbers = #tpu.dot_dimension_numbers<[1], [0], [0], [1], [0, 0, 1, 1], [], []>} : vector<16x256xbf16>, vector<256x7xbf16>, vector<16x7xf32> -> vector<16x7xf32>
    %c0_14 = arith.constant 0 : index
    %c0_15 = arith.constant 0 : index
    %41 = vector.load %arg7[%c0_14, %c0_15] : memref<1x7xf32, #tpu.memory_space<vmem>>, vector<1x7xf32>
    %42 = vector.broadcast %41 : vector<1x7xf32> to vector<16x7xf32>
    %43 = arith.addf %40, %42 : vector<16x7xf32>
    %c0_16 = arith.constant 0 : index
    %c0_17 = arith.constant 0 : index
    %44 = vector.load %arg8[%c0_16, %c0_17] : memref<16x7xf32, #tpu.memory_space<vmem>>, vector<16x7xf32>
    tpu.vector_store %arg8[%c0_16, %c0_17], %43 {strides = array<i32>} : memref<16x7xf32, #tpu.memory_space<vmem>>, vector<16x7xf32>,
    return
  }
  func.func @transform_0(%arg0: i32) -> (i32, i32) {
    %c0_i32 = arith.constant 0 : i32
    %c0_i32_0 = arith.constant 0 : i32
    return %arg0, %c0_i32 : i32, i32
  }
  func.func @transform_1(%arg0: i32) -> (i32, i32) {
    %c0_i32 = arith.constant 0 : i32
    %c0_i32_0 = arith.constant 0 : i32
    %c0_i32_1 = arith.constant 0 : i32
    return %c0_i32, %c0_i32_0 : i32, i32
  }
  func.func @transform_2(%arg0: i32) -> (i32, i32) {
    %c0_i32 = arith.constant 0 : i32
    %c0_i32_0 = arith.constant 0 : i32
    %c0_i32_1 = arith.constant 0 : i32
    return %c0_i32, %c0_i32_0 : i32, i32
  }
  func.func @transform_3(%arg0: i32) -> (i32, i32) {
    %c0_i32 = arith.constant 0 : i32
    %c0_i32_0 = arith.constant 0 : i32
    %c0_i32_1 = arith.constant 0 : i32
    return %c0_i32, %c0_i32_0 : i32, i32
  }
  func.func @transform_4(%arg0: i32) -> (i32, i32) {
    %c0_i32 = arith.constant 0 : i32
    %c0_i32_0 = arith.constant 0 : i32
    %c0_i32_1 = arith.constant 0 : i32
    return %c0_i32, %c0_i32_0 : i32, i32
  }
  func.func @transform_5(%arg0: i32) -> (i32, i32) {
    %c0_i32 = arith.constant 0 : i32
    %c0_i32_0 = arith.constant 0 : i32
    %c0_i32_1 = arith.constant 0 : i32
    return %c0_i32, %c0_i32_0 : i32, i32
  }
  func.func @transform_6(%arg0: i32) -> (i32, i32) {
    %c0_i32 = arith.constant 0 : i32
    %c0_i32_0 = arith.constant 0 : i32
    %c0_i32_1 = arith.constant 0 : i32
    return %c0_i32, %c0_i32_0 : i32, i32
  }
  func.func @transform_7(%arg0: i32) -> (i32, i32) {
    %c0_i32 = arith.constant 0 : i32
    %c0_i32_0 = arith.constant 0 : i32
    return %arg0, %c0_i32 : i32, i32
  }
}

</mosaic_0001>

<llo_original>
// kernel: tpu_custom_call.1
$region0: #{tpu_custom_call.1}
  #allocation0 [shape = 'u32[]', space=smem, size = 0x4, offset = 0x4, fixed_abs, tag = 'smem constant byte address 0x4 - core index']
  #allocation1 [shape = 'u32[144,128]{1,0:T(1,128)}', space=vmem, size = 0x12000, scoped, tag = 'internal scratch']
  %s0 = inlined_call_operand.vmem [shape: f32[16,4], index: 0, kind: input, shape index: {}]
  %s1 = inlined_call_operand.vmem [shape: f32[4,128], index: 1, kind: input, shape index: {}]
  %s2 = inlined_call_operand.vmem [shape: f32[1,128], index: 2, kind: input, shape index: {}]
  %s3 = inlined_call_operand.vmem [shape: bf16[128,256], index: 3, kind: input, shape index: {}]
  %s4 = inlined_call_operand.vmem [shape: f32[1,256], index: 4, kind: input, shape index: {}]
  %s5 = inlined_call_operand.vmem [shape: bf16[256,7], index: 5, kind: input, shape index: {}]
  %s6 = inlined_call_operand.vmem [shape: f32[1,7], index: 6, kind: input, shape index: {}]
  %s7 = inlined_call_operand.vmem [shape: f32[16,7], index: 7, kind: output, shape index: {}]
  %s8 = sld [smem:[#allocation0]]
  $region38: #{tpu_custom_call.1} parent=0
    _
  %s10 = ssub.s32 1, %s8
  %s11 = scalar_select 0, %s10, %s8
  // Predicated region
  $region2: #{tpu_custom_call.1} parent=0 // pred_check
    _
  $region3: #{tpu_custom_call.1} parent=0 // pred_check_branch
    %13 = sbr.rel (0) target = $region5
  $region4: #{tpu_custom_call.1} parent=0 // pred_region
    _
  $region5: #{tpu_custom_call.1} parent=0 // pred_fallthru
    _
  // Predicated region
  $region6: #{tpu_custom_call.1} parent=0 // pred_check
    _
  $region7: #{tpu_custom_call.1} parent=0 // pred_check_branch
    %15 = sbr.rel (0) target = $region9
  $region8: #{tpu_custom_call.1} parent=0 // pred_region
    _
  $region9: #{tpu_custom_call.1} parent=0 // pred_fallthru
    _
  // Predicated region
  $region10: #{tpu_custom_call.1} parent=0 // pred_check
    _
  $region11: #{tpu_custom_call.1} parent=0 // pred_check_branch
    %17 = sbr.rel (0) target = $region13
  $region12: #{tpu_custom_call.1} parent=0 // pred_region
    _
  $region13: #{tpu_custom_call.1} parent=0 // pred_fallthru
    _
  // Predicated region
  $region14: #{tpu_custom_call.1} parent=0 // pred_check
    _
  $region15: #{tpu_custom_call.1} parent=0 // pred_check_branch
    %19 = sbr.rel (0) target = $region17
  $region16: #{tpu_custom_call.1} parent=0 // pred_region
    _
  $region17: #{tpu_custom_call.1} parent=0 // pred_fallthru
    _
  // Predicated region
  $region18: #{tpu_custom_call.1} parent=0 // pred_check
    _
  $region19: #{tpu_custom_call.1} parent=0 // pred_check_branch
    %21 = sbr.rel (0) target = $region21
  $region20: #{tpu_custom_call.1} parent=0 // pred_region
    _
  $region21: #{tpu_custom_call.1} parent=0 // pred_fallthru
    _
  // Predicated region
  $region22: #{tpu_custom_call.1} parent=0 // pred_check
    _
  $region23: #{tpu_custom_call.1} parent=0 // pred_check_branch
    %23 = sbr.rel (0) target = $region25
  $region24: #{tpu_custom_call.1} parent=0 // pred_region
    _
  $region25: #{tpu_custom_call.1} parent=0 // pred_fallthru
    _
  // Predicated region
  $region26: #{tpu_custom_call.1} parent=0 // pred_check
    _
  $region27: #{tpu_custom_call.1} parent=0 // pred_check_branch
    %25 = sbr.rel (0) target = $region29
  $region28: #{tpu_custom_call.1} parent=0 // pred_region
    _
  $region29: #{tpu_custom_call.1} parent=0 // pred_fallthru
    _
  %v27 = vld [vmem:[%s0] sm:$0xff]
  %v28 = vld [vmem:[%s0 + $0x8] sm:$0xff]
  %v29 = vld [vmem:[%s1] sm:$0xf]
  %31 = vset.pattern.permute.xlu0 0
  %32 = vperm.xlu0 %31, %v27
  %v33 = vpop.permute.xlu0 %32
  %36 = vset.pattern.permute.xlu0 0
  %37 = vperm.xlu0 %36, %v28
  %v38 = vpop.permute.xlu0 %37
  %v40 = vlaneseq
  %v41 = vshrl.u32 %v40, 7
  %v42 = vsub.s32 0, %v41
  %v43 = vrot.slane %v29, %v42
  %v44 = vmul.f32 %v33, %v43
  %v45 = vmul.f32 %v38, %v43
  %46 = vset.pattern.permute.xlu0 1
  %47 = vperm.xlu0 %46, %v27
  %v48 = vpop.permute.xlu0 %47
  %50 = vset.pattern.permute.xlu0 1
  %51 = vperm.xlu0 %50, %v28
  %v52 = vpop.permute.xlu0 %51
  %v54 = vlaneseq
  %v55 = vshrl.u32 %v54, 7
  %v56 = vsub.s32 1, %v55
  %v57 = vrot.slane %v29, %v56
  %v58 = vmul.f32 %v48, %v57
  %v59 = vmul.f32 %v52, %v57
  %v60 = vadd.f32 %v44, %v58
  %v61 = vadd.f32 %v45, %v59
  %62 = vset.pattern.permute.xlu0 2
  %63 = vperm.xlu0 %62, %v27
  %v64 = vpop.permute.xlu0 %63
  %66 = vset.pattern.permute.xlu0 2
  %67 = vperm.xlu0 %66, %v28
  %v68 = vpop.permute.xlu0 %67
  %v70 = vlaneseq
  %v71 = vshrl.u32 %v70, 7
  %v72 = vsub.s32 2, %v71
  %v73 = vrot.slane %v29, %v72
  %v74 = vmul.f32 %v64, %v73
  %v75 = vmul.f32 %v68, %v73
  %v76 = vadd.f32 %v60, %v74
  %v77 = vadd.f32 %v61, %v75
  %78 = vset.pattern.permute.xlu0 3
  %79 = vperm.xlu0 %78, %v27
  %v80 = vpop.permute.xlu0 %79
  %82 = vset.pattern.permute.xlu0 3
  %83 = vperm.xlu0 %82, %v28
  %v84 = vpop.permute.xlu0 %83
  %v86 = vlaneseq
  %v87 = vshrl.u32 %v86, 7
  %v88 = vsub.s32 3, %v87
  %v89 = vrot.slane %v29, %v88
  %v90 = vmul.f32 %v80, %v89
  %v91 = vmul.f32 %v84, %v89
  %v92 = vadd.f32 %v76, %v90
  %v93 = vadd.f32 %v77, %v91
  %v94 = vld [vmem:[%s2] sm:$0x1]
  %v96 = vlaneseq
  %v97 = vshrl.u32 %v96, 7
  %v98 = vsub.s32 0, %v97
  %v99 = vrot.slane %v94, %v98
  %v101 = vadd.f32 %v92, %v99
  %v102 = vadd.f32 %v93, %v99
  %v103 = vmax.f32 %v101, 0.0
  %v104 = vmax.f32 %v102, 0.0
  %v105 = vpack.c.bf16 %v104, %v103
  %v106 = vld [vmem:[%s3] sm:$0xff]
  %v107 = vld [vmem:[%s3 + $0x8] sm:$0xff]
  %v108 = vld [vmem:[%s3 + $0x10] sm:$0xff]
  %v109 = vld [vmem:[%s3 + $0x18] sm:$0xff]
  %v110 = vld [vmem:[%s3 + $0x20] sm:$0xff]
  %v111 = vld [vmem:[%s3 + $0x28] sm:$0xff]
  %v112 = vld [vmem:[%s3 + $0x30] sm:$0xff]
  %v113 = vld [vmem:[%s3 + $0x38] sm:$0xff]
  %v114 = vld [vmem:[%s3 + $0x40] sm:$0xff]
  %v115 = vld [vmem:[%s3 + $0x48] sm:$0xff]
  %v116 = vld [vmem:[%s3 + $0x50] sm:$0xff]
  %v117 = vld [vmem:[%s3 + $0x58] sm:$0xff]
  %v118 = vld [vmem:[%s3 + $0x60] sm:$0xff]
  %v119 = vld [vmem:[%s3 + $0x68] sm:$0xff]
  %v120 = vld [vmem:[%s3 + $0x70] sm:$0xff]
  %v121 = vld [vmem:[%s3 + $0x78] sm:$0xff]
  %v122 = vld [vmem:[%s4] sm:$0x3]
  %v124 = vlaneseq
  %v125 = vshrl.u32 %v124, 7
  %v126 = vsub.s32 0, %v125
  %v127 = vrot.slane %v122, %v126
  %v128 = vlaneseq
  %v129 = vshrl.u32 %v128, 7
  %v130 = vsub.s32 1, %v129
  %v131 = vrot.slane %v122, %v130
  %v150 = vunpack.c.l.b16 %v106
  %v151 = vunpack.c.h.b16 %v106
  %v152 = vunpack.c.l.b16 %v107
  %v153 = vunpack.c.h.b16 %v107
  %v154 = vunpack.c.l.b16 %v108
  %v155 = vunpack.c.h.b16 %v108
  %v156 = vunpack.c.l.b16 %v109
  %v157 = vunpack.c.h.b16 %v109
  %v158 = vunpack.c.l.b16 %v110
  %v159 = vunpack.c.h.b16 %v110
  %v160 = vunpack.c.l.b16 %v111
  %v161 = vunpack.c.h.b16 %v111
  %v162 = vunpack.c.l.b16 %v112
  %v163 = vunpack.c.h.b16 %v112
  %v164 = vunpack.c.l.b16 %v113
  %v165 = vunpack.c.h.b16 %v113
  %v166 = vunpack.c.l.b16 %v114
  %v167 = vunpack.c.h.b16 %v114
  %v168 = vunpack.c.l.b16 %v115
  %v169 = vunpack.c.h.b16 %v115
  %v170 = vunpack.c.l.b16 %v116
  %v171 = vunpack.c.h.b16 %v116
  %v172 = vunpack.c.l.b16 %v117
  %v173 = vunpack.c.h.b16 %v117
  %v174 = vunpack.c.l.b16 %v118
  %v175 = vunpack.c.h.b16 %v118
  %v176 = vunpack.c.l.b16 %v119
  %v177 = vunpack.c.h.b16 %v119
  %v178 = vunpack.c.l.b16 %v120
  %v179 = vunpack.c.h.b16 %v120
  %v180 = vunpack.c.l.b16 %v121
  %v181 = vunpack.c.h.b16 %v121
  %v182 = vpack.c.b16 %v152, %v150
  %v183 = vpack.c.b16 %v153, %v151
  %v184 = vpack.c.b16 %v156, %v154
  %v185 = vpack.c.b16 %v157, %v155
  %v186 = vpack.c.b16 %v160, %v158
  %v187 = vpack.c.b16 %v161, %v159
  %v188 = vpack.c.b16 %v164, %v162
  %v189 = vpack.c.b16 %v165, %v163
  %v190 = vpack.c.b16 %v168, %v166
  %v191 = vpack.c.b16 %v169, %v167
  %v192 = vpack.c.b16 %v172, %v170
  %v193 = vpack.c.b16 %v173, %v171
  %v194 = vpack.c.b16 %v176, %v174
  %v195 = vpack.c.b16 %v177, %v175
  %v196 = vpack.c.b16 %v180, %v178
  %v197 = vpack.c.b16 %v181, %v179
  %214 = vmatprep.subr.bf16.mxu0 %v197
  %215 = vmatpush1.bf16.msra.mxu0 %v196
  %216 = vmatprep.subr.bf16.mxu0 %v195
  %217 = vmatpush1.bf16.msra.mxu0 %v194
  %218 = vmatprep.subr.bf16.mxu0 %v193
  %219 = vmatpush1.bf16.msra.mxu0 %v192
  %220 = vmatprep.subr.bf16.mxu0 %v191
  %221 = vmatpush1.bf16.msra.mxu0 %v190
  %222 = vmatprep.subr.bf16.mxu0 %v189
  %223 = vmatpush1.bf16.msra.mxu0 %v188
  %224 = vmatprep.subr.bf16.mxu0 %v187
  %225 = vmatpush1.bf16.msra.mxu0 %v186
  %226 = vmatprep.subr.bf16.mxu0 %v185
  %227 = vmatpush1.bf16.msra.mxu0 %v184
  %228 = vmatprep.subr.bf16.mxu0 %v183
  %229 = vmatpush1.bf16.msra.mxu0 %v182
  %230 = vmatprep.subr.bf16.mxu0 0
  %231 = vmatpush2.bf16.msra.mxu0 0
  %232 = vmatprep.subr.bf16.mxu0 0
  %233 = vmatpush2.bf16.msra.mxu0 0
  %234 = vmatprep.subr.bf16.mxu0 0
  %235 = vmatpush2.bf16.msra.mxu0 0
  %236 = vmatprep.subr.bf16.mxu0 0
  %237 = vmatpush2.bf16.msra.mxu0 0
  %238 = vmatprep.subr.bf16.mxu0 0
  %239 = vmatpush2.bf16.msra.mxu0 0
  %240 = vmatprep.subr.bf16.mxu0 0
  %241 = vmatpush2.bf16.msra.mxu0 0
  %242 = vmatprep.subr.bf16.mxu0 0
  %243 = vmatpush2.bf16.msra.mxu0 0
  %244 = vmatprep.subr.bf16.mxu0 0
  %245 = vmatpush2.bf16.msra.mxu0 0
  %246 = vmatprep.mubr.bf16.mxu0 0
  %247 = vmatmul.mubr.bf16.gmra.mxu0 %v105
  %v248 = vpop.f32.mrf.mxu0
  %v249 = vadd.f32 %v127, %v248
  %v250 = vpop.f32.mrf.mxu0
  %v251 = vadd.f32 %v131, %v250
  %v252 = vpop.f32.mrf.mxu0
  %v253 = vadd.f32 %v127, %v252
  %v254 = vpop.f32.mrf.mxu0
  %v255 = vadd.f32 %v131, %v254
  %256 = vdwg.mxu0
  %v257 = vmax.f32 %v249, 0.0
  %v258 = vmax.f32 %v251, 0.0
  %v259 = vmax.f32 %v253, 0.0
  %v260 = vmax.f32 %v255, 0.0
  %v261 = vpack.c.bf16 %v259, %v257
  %v262 = vpack.c.bf16 %v260, %v258
  %v263 = vld [vmem:[%s5] sm:$0xf]
  %v264 = vld [vmem:[%s5 + $0x4] sm:$0xf]
  %v265 = vld [vmem:[%s5 + $0x8] sm:$0xf]
  %v266 = vld [vmem:[%s5 + $0xc] sm:$0xf]
  %v267 = vld [vmem:[%s5 + $0x10] sm:$0xf]
  %v268 = vld [vmem:[%s5 + $0x14] sm:$0xf]
  %v269 = vld [vmem:[%s5 + $0x18] sm:$0xf]
  %v270 = vld [vmem:[%s5 + $0x1c] sm:$0xf]
  %v271 = vld [vmem:[%s5 + $0x20] sm:$0xf]
  %v272 = vld [vmem:[%s5 + $0x24] sm:$0xf]
  %v273 = vld [vmem:[%s5 + $0x28] sm:$0xf]
  %v274 = vld [vmem:[%s5 + $0x2c] sm:$0xf]
  %v275 = vld [vmem:[%s5 + $0x30] sm:$0xf]
  %v276 = vld [vmem:[%s5 + $0x34] sm:$0xf]
  %v277 = vld [vmem:[%s5 + $0x38] sm:$0xf]
  %v278 = vld [vmem:[%s5 + $0x3c] sm:$0xf]
  %v279 = vld [vmem:[%s5 + $0x40] sm:$0xf]
  %v280 = vld [vmem:[%s5 + $0x44] sm:$0xf]
  %v281 = vld [vmem:[%s5 + $0x48] sm:$0xf]
  %v282 = vld [vmem:[%s5 + $0x4c] sm:$0xf]
  %v283 = vld [vmem:[%s5 + $0x50] sm:$0xf]
  %v284 = vld [vmem:[%s5 + $0x54] sm:$0xf]
  %v285 = vld [vmem:[%s5 + $0x58] sm:$0xf]
  %v286 = vld [vmem:[%s5 + $0x5c] sm:$0xf]
  %v287 = vld [vmem:[%s5 + $0x60] sm:$0xf]
  %v288 = vld [vmem:[%s5 + $0x64] sm:$0xf]
  %v289 = vld [vmem:[%s5 + $0x68] sm:$0xf]
  %v290 = vld [vmem:[%s5 + $0x6c] sm:$0xf]
  %v291 = vld [vmem:[%s5 + $0x70] sm:$0xf]
  %v292 = vld [vmem:[%s5 + $0x74] sm:$0xf]
  %v293 = vld [vmem:[%s5 + $0x78] sm:$0xf]
  %v294 = vld [vmem:[%s5 + $0x7c] sm:$0xf]
  %v295 = vld [vmem:[%s6] sm:$0x1]
  %v297 = vlaneseq
  %v298 = vshrl.u32 %v297, 7
  %v299 = vsub.s32 0, %v298
  %v300 = vrot.slane %v295, %v299
  %v334 = vunpack.c.l.b16 %v263
  %v335 = vunpack.c.l.b16 %v264
  %v336 = vunpack.c.l.b16 %v265
  %v337 = vunpack.c.l.b16 %v266
  %v338 = vunpack.c.l.b16 %v267
  %v339 = vunpack.c.l.b16 %v268
  %v340 = vunpack.c.l.b16 %v269
  %v341 = vunpack.c.l.b16 %v270
  %v342 = vunpack.c.l.b16 %v271
  %v343 = vunpack.c.l.b16 %v272
  %v344 = vunpack.c.l.b16 %v273
  %v345 = vunpack.c.l.b16 %v274
  %v346 = vunpack.c.l.b16 %v275
  %v347 = vunpack.c.l.b16 %v276
  %v348 = vunpack.c.l.b16 %v277
  %v349 = vunpack.c.l.b16 %v278
  %v350 = vunpack.c.l.b16 %v279
  %v351 = vunpack.c.l.b16 %v280
  %v352 = vunpack.c.l.b16 %v281
  %v353 = vunpack.c.l.b16 %v282
  %v354 = vunpack.c.l.b16 %v283
  %v355 = vunpack.c.l.b16 %v284
  %v356 = vunpack.c.l.b16 %v285
  %v357 = vunpack.c.l.b16 %v286
  %v358 = vunpack.c.l.b16 %v287
  %v359 = vunpack.c.l.b16 %v288
  %v360 = vunpack.c.l.b16 %v289
  %v361 = vunpack.c.l.b16 %v290
  %v362 = vunpack.c.l.b16 %v291
  %v363 = vunpack.c.l.b16 %v292
  %v364 = vunpack.c.l.b16 %v293
  %v365 = vunpack.c.l.b16 %v294
  %v366 = vpack.c.b16 %v335, %v334
  %v367 = vpack.c.b16 %v337, %v336
  %v368 = vpack.c.b16 %v339, %v338
  %v369 = vpack.c.b16 %v341, %v340
  %v370 = vpack.c.b16 %v343, %v342
  %v371 = vpack.c.b16 %v345, %v344
  %v372 = vpack.c.b16 %v347, %v346
  %v373 = vpack.c.b16 %v349, %v348
  %v374 = vpack.c.b16 %v351, %v350
  %v375 = vpack.c.b16 %v353, %v352
  %v376 = vpack.c.b16 %v355, %v354
  %v377 = vpack.c.b16 %v357, %v356
  %v378 = vpack.c.b16 %v359, %v358
  %v379 = vpack.c.b16 %v361, %v360
  %v380 = vpack.c.b16 %v363, %v362
  %v381 = vpack.c.b16 %v365, %v364
  %398 = vmatprep.subr.bf16.mxu0 0
  %399 = vmatpush1.bf16.msra.mxu0 %v373
  %400 = vmatprep.subr.bf16.mxu0 0
  %401 = vmatpush1.bf16.msra.mxu0 %v372
  %402 = vmatprep.subr.bf16.mxu0 0
  %403 = vmatpush1.bf16.msra.mxu0 %v371
  %404 = vmatprep.subr.bf16.mxu0 0
  %405 = vmatpush1.bf16.msra.mxu0 %v370
  %406 = vmatprep.subr.bf16.mxu0 0
  %407 = vmatpush1.bf16.msra.mxu0 %v369
  %408 = vmatprep.subr.bf16.mxu0 0
  %409 = vmatpush1.bf16.msra.mxu0 %v368
  %410 = vmatprep.subr.bf16.mxu0 0
  %411 = vmatpush1.bf16.msra.mxu0 %v367
  %412 = vmatprep.subr.bf16.mxu0 0
  %413 = vmatpush1.bf16.msra.mxu0 %v366
  %414 = vmatprep.subr.bf16.mxu0 0
  %415 = vmatpush2.bf16.msra.mxu0 %v381
  %416 = vmatprep.subr.bf16.mxu0 0
  %417 = vmatpush2.bf16.msra.mxu0 %v380
  %418 = vmatprep.subr.bf16.mxu0 0
  %419 = vmatpush2.bf16.msra.mxu0 %v379
  %420 = vmatprep.subr.bf16.mxu0 0
  %421 = vmatpush2.bf16.msra.mxu0 %v378
  %422 = vmatprep.subr.bf16.mxu0 0
  %423 = vmatpush2.bf16.msra.mxu0 %v377
  %424 = vmatprep.subr.bf16.mxu0 0
  %425 = vmatpush2.bf16.msra.mxu0 %v376
  %426 = vmatprep.subr.bf16.mxu0 0
  %427 = vmatpush2.bf16.msra.mxu0 %v375
  %428 = vmatprep.subr.bf16.mxu0 0
  %429 = vmatpush2.bf16.msra.mxu0 %v374
  %430 = vmatprep.mubr.bf16.mxu0 %v262
  %431 = vmatmul.mubr.bf16.gmra.mxu0 %v261
  %v432 = vpop.f32.mrf.mxu0
  %v433 = vadd.f32 %v300, %v432
  %v434 = vpop.f32.mrf.mxu0
  %v435 = vpop.f32.mrf.mxu0
  %v436 = vadd.f32 %v300, %v435
  %v437 = vpop.f32.mrf.mxu0
  %438 = vdwg.mxu0
  %vm439 = vcmask 56320
  %440 = vst.msk [vmem:[%s7] sm:$0xff] %vm439, %v433
  %441 = vst.msk [vmem:[%s7 + $0x8] sm:$0xff] %vm439, %v436
  // Predicated region
  $region30: #{tpu_custom_call.1} parent=0 // pred_check
    _
  $region31: #{tpu_custom_call.1} parent=0 // pred_check_branch
    %443 = sbr.rel (0) target = $region33
  $region32: #{tpu_custom_call.1} parent=0 // pred_region
    _
  $region33: #{tpu_custom_call.1} parent=0 // pred_fallthru
    _
  // Predicated region
  $region34: #{tpu_custom_call.1} parent=0 // pred_check
    _
  $region35: #{tpu_custom_call.1} parent=0 // pred_check_branch
    %445 = sbr.rel (0) target = $region37
  $region36: #{tpu_custom_call.1} parent=0 // pred_region
    _
  $region37: #{tpu_custom_call.1} parent=0 // pred_fallthru
    _

</llo_original>
